<compile_context>
chip_gen: v5e
topology: v5e:2x2
jax: 0.10.0
libtpu: 0.0.40
codegen_flags: <defaults>
</compile_context>

<pallas_src>
import jax
import jax.numpy as jnp
from jax.experimental import pallas as pl
from jax.experimental.pallas import tpu as pltpu

# Hyperparameters implied by the module (RLhp / tohp); small synthetic values.
NUM_STATES = 16      # RLhp.NUM_STATES
NUM_ACTIONS = 8      # RLhp.NUM_ACTIONS
REQUEST_NUM = 3      # tohp.request_num
HID = 32             # shared-trunk / head hidden width
LN_EPS = 1e-5

_LANE = 128          # batch tile granularity (lane width)
_MAX_B_TILE = 2048   # max batch columns per grid step (multiple of 128)


def _dqn_kernel(x_ref,
                w1_ref, b1_ref,
                w2_ref, b2_ref,
                w3_ref, b3_ref,
                wr_ref, br_ref,          # packed request layers (R*32, 32), (R*32, 1)
                wc_ref, bc_ref,          # block-diag folded head (R*A, R*32), (R*A, 1)
                o_ref):                  # output (R*A, B_TILE)
    """One batch tile; activations are (features, B_TILE) — batch on lanes."""
    f32 = jnp.float32
    bf16 = jnp.bfloat16

    x = x_ref[...].astype(bf16)                                         # (S, Bt)

    # Shared trunk: 3 Linear + ReLU on the MXU (bf16 in, f32 accumulate).
    h1 = jnp.maximum(
        jnp.dot(w1_ref[...], x, preferred_element_type=f32) + b1_ref[...], 0.0)
    h2 = jnp.maximum(
        jnp.dot(w2_ref[...], h1.astype(bf16),
                preferred_element_type=f32) + b2_ref[...], 0.0)
    xs = jnp.maximum(
        jnp.dot(w3_ref[...], h2.astype(bf16),
                preferred_element_type=f32) + b3_ref[...], 0.0)          # (32, Bt)

    # All R request-head first layers in one packed matmul: (R*32, 32)@(32, Bt).
    t = jnp.maximum(
        jnp.dot(wr_ref[...], xs.astype(bf16),
                preferred_element_type=f32) + br_ref[...], 0.0)          # (96, Bt)

    bt = t.shape[-1]

    # LayerNorm per 32-row segment (biased variance, matches nn.LayerNorm):
    # segmented sublane reduction, all R segments at once.
    t3 = t.reshape(REQUEST_NUM, HID, bt)
    mean = jnp.mean(t3, axis=1, keepdims=True)
    cen = t3 - mean
    var = jnp.mean(cen * cen, axis=1, keepdims=True)
    normed = (cen * jax.lax.rsqrt(var + LN_EPS)).reshape(REQUEST_NUM * HID, bt)

    # Block-diagonal candroute head (LN gamma/beta folded in): one MXU issue.
    logits = (jnp.dot(wc_ref[...], normed.astype(bf16),
                      preferred_element_type=f32) + bc_ref[...])         # (24, Bt)

    # Softmax over actions: segmented reduce over 8 sublanes per request.
    l3 = logits.reshape(REQUEST_NUM, NUM_ACTIONS, bt)
    l3 = l3 - jnp.max(l3, axis=1, keepdims=True)
    e = jnp.exp(l3)
    p = e * pl.reciprocal(jnp.sum(e, axis=1, keepdims=True), approx=True)

    # Lane-dense store: last dim is B_TILE (multiple of 128).
    o_ref[...] = p.reshape(REQUEST_NUM * NUM_ACTIONS, bt).astype(o_ref.dtype)


def pack_params(params):
    """Weight packing / folding — call ONCE at parameter-load time.

    Weights are kept in PyTorch (out, in) layout (batch-on-lanes kernel does
    W @ act).  LayerNorm affine is folded into the candroute head, the R
    request first-layers are stacked, and the R candroute layers become one
    block-diagonal matrix.
    """
    R, A, H = REQUEST_NUM, NUM_ACTIONS, HID
    f32, bf16 = jnp.float32, jnp.bfloat16

    gamma = params["gamma"].astype(f32)                    # (32,)
    beta = params["beta"].astype(f32)                      # (32,)
    wc = params["wc"].astype(f32)                          # (R, A, 32)  (out, in)
    bc = params["bc"].astype(f32)                          # (R, A)

    # Fold LN affine: Wc @ (n*gamma + beta) + bc == (Wc*gamma) @ n + (Wc@beta + bc)
    wc_f = wc * gamma[None, None, :]                       # (R, A, 32)
    bc_f = bc + jnp.einsum("rah,h->ra", wc, beta)          # (R, A)

    # Block-diagonal head weight: (R*A, R*32).
    wc_bd = jnp.zeros((R * A, R * H), f32)
    for r in range(R):
        wc_bd = wc_bd.at[r * A:(r + 1) * A, r * H:(r + 1) * H].set(wc_f[r])

    return (
        params["w1"].astype(bf16),                         # (32, S)
        params["b1"].reshape(-1, 1).astype(f32),           # (32, 1)
        params["w2"].astype(bf16),                         # (64, 32)
        params["b2"].reshape(-1, 1).astype(f32),           # (64, 1)
        params["w3"].astype(bf16),                         # (32, 64)
        params["b3"].reshape(-1, 1).astype(f32),           # (32, 1)
        params["wr"].reshape(R * H, H).astype(bf16),       # (R*32, 32)
        params["br"].reshape(R * H, 1).astype(f32),        # (R*32, 1)
        wc_bd.astype(bf16),                                # (R*A, R*32)
        bc_f.reshape(R * A, 1).astype(f32),                # (R*A, 1)
    )


def _tile_batch(B):
    """Pick (b_tile, grid_b, b_pad): tiles are multiples of 128 lanes, capped
    at _MAX_B_TILE; when B is big enough the grid has >= 2 steps so both v7x
    TensorCores get work; padding is kept minimal for awkward B."""
    g = max(1, pl.cdiv(B, _MAX_B_TILE))
    if B > _LANE:
        g = max(g, 2)
    b_tile = min(_MAX_B_TILE, _LANE * pl.cdiv(B, g * _LANE))
    grid_b = pl.cdiv(B, b_tile)
    return b_tile, grid_b, grid_b * b_tile


def my_dqn_forward(x, packed):
    """Full MyDQN forward in one batch-tiled Pallas call.

    x: (B, NUM_STATES) float32; packed = pack_params(params) (precomputed once).
    Returns: tuple of REQUEST_NUM arrays, each (B, NUM_ACTIONS) float32.
    """
    B = x.shape[0]
    R, A, S = REQUEST_NUM, NUM_ACTIONS, NUM_STATES

    b_tile, grid_b, b_pad = _tile_batch(B)

    # Batch on lanes: x transposed; kept f32 (bf16 cast happens in-kernel).
    x_t = x.astype(jnp.float32).T                                       # (S, B)
    if b_pad != B:
        x_t = jnp.pad(x_t, ((0, 0), (0, b_pad - B)))

    def _w_spec(arr):
        return pl.BlockSpec(arr.shape, lambda i: (0, 0))                # resident

    in_specs = ([pl.BlockSpec((S, b_tile), lambda i: (0, i))]
                + [_w_spec(w) for w in packed])
    out_spec = pl.BlockSpec((R * A, b_tile), lambda i: (0, i))

    flops = 2 * b_pad * (S * 32 + 32 * 64 + 64 * 32
                         + 32 * R * HID + (R * HID) * (R * A))
    transcendentals = b_pad * R * (A + 2)                   # exp + rsqrt + recip
    bytes_accessed = (b_pad * (S + R * A) * 4
                      + sum(int(w.size) * w.dtype.itemsize for w in packed))

    out = pl.pallas_call(
        _dqn_kernel,
        grid=(grid_b,),
        in_specs=in_specs,
        out_specs=out_spec,
        out_shape=jax.ShapeDtypeStruct((R * A, b_pad), jnp.float32),
        compiler_params=pltpu.CompilerParams(
            dimension_semantics=("parallel",),
            # > defaults on v5e (16 MiB) / v6e & v7x (32 MiB); actual usage at
            # b_tile=2048 is ~6-8 MiB, well under v7x's 64 MiB physical VMEM.
            vmem_limit_bytes=48 * 1024 * 1024),
        cost_estimate=pl.CostEstimate(
            flops=flops,
            transcendentals=transcendentals,
            bytes_accessed=bytes_accessed),
    )(x_t, *packed)                                                     # (R*A, b_pad)

    out = out[:, :B].reshape(R, A, B)
    return tuple(jnp.transpose(out[r]) for r in range(R))


def init_params(key):
    """Deterministic synthetic parameters in the PyTorch nn.Linear layout
    (weight is (out, in)).  Weights ~ N(0, 0.1) as in the module; LayerNorm
    uses the nn.LayerNorm defaults (gamma=1, beta=0)."""
    ks = jax.random.split(key, 10)

    def w(k, out_dim, in_dim):
        return (0.1 * jax.random.normal(k, (out_dim, in_dim))).astype(jnp.float32)

    def b(k, dim):
        return (0.01 * jax.random.normal(k, (dim,))).astype(jnp.float32)

    return {
        "w1": w(ks[0], 32, NUM_STATES), "b1": b(ks[1], 32),
        "w2": w(ks[2], 64, 32),         "b2": b(ks[3], 64),
        "w3": w(ks[4], 32, 64),         "b3": b(ks[5], 32),
        "wr": (0.1 * jax.random.normal(ks[6], (REQUEST_NUM, 32, 32))).astype(jnp.float32),
        "br": (0.01 * jax.random.normal(ks[7], (REQUEST_NUM, 32))).astype(jnp.float32),
        "wc": (0.1 * jax.random.normal(ks[8], (REQUEST_NUM, NUM_ACTIONS, 32))).astype(jnp.float32),
        "bc": (0.01 * jax.random.normal(ks[9], (REQUEST_NUM, NUM_ACTIONS))).astype(jnp.float32),
        "gamma": jnp.ones((32,), jnp.float32),
        "beta": jnp.zeros((32,), jnp.float32),
    }


def _reference_forward(x, p):
    """Plain-JAX reference (same bf16 weight/activation quantization as kernel)."""
    def mm(a, w):                     # a: (B, in), w: (out, in)
        return jnp.dot(a.astype(jnp.bfloat16), w.astype(jnp.bfloat16).T,
                       preferred_element_type=jnp.float32)

    h1 = jax.nn.relu(mm(x, p["w1"]) + p["b1"])
    h2 = jax.nn.relu(mm(h1, p["w2"]) + p["b2"])
    xs = jax.nn.relu(mm(h2, p["w3"]) + p["b3"])
    outs = []
    for r in range(REQUEST_NUM):
        t = jax.nn.relu(mm(xs, p["wr"][r]) + p["br"][r])
        mean = t.mean(-1, keepdims=True)
        var = ((t - mean) ** 2).mean(-1, keepdims=True)
        n = (t - mean) * jax.lax.rsqrt(var + LN_EPS) * p["gamma"] + p["beta"]
        outs.append(jax.nn.softmax(mm(n, p["wc"][r]) + p["bc"][r], axis=-1))
    return tuple(outs)


if __name__ == "__main__":
    key = jax.random.PRNGKey(0)
    pkey, xkey = jax.random.split(key)
    params = init_params(pkey)
    packed = pack_params(params)          # hoisted: done once, not per forward

    B = 2
    x = jax.random.normal(xkey, (B, NUM_STATES), dtype=jnp.float32)

    fwd = jax.jit(my_dqn_forward)
    outs = jax.block_until_ready(fwd(x, packed))

    refs = _reference_forward(x, params)
    for o, r in zip(outs, refs):
        assert o.shape == (B, NUM_ACTIONS)
        # Tolerance reflects bf16 weights/activations + approx softmax recip.
        assert jnp.allclose(o, r, atol=1e-2, rtol=1e-2), "mismatch vs reference"
        assert jnp.allclose(jnp.sum(o, axis=-1), 1.0, atol=1e-2)

    print("KERNEL_OK")
</pallas_src>

<mosaic_0001>
module attributes {stable_mosaic.version = 11 : i64} {
  func.func @_dqn_kernel(%arg0: i32, %arg1: memref<16x128xf32, #tpu.memory_space<vmem>>, %arg2: memref<32x16xbf16, #tpu.memory_space<vmem>>, %arg3: memref<32x1xf32, #tpu.memory_space<vmem>>, %arg4: memref<64x32xbf16, #tpu.memory_space<vmem>>, %arg5: memref<64x1xf32, #tpu.memory_space<vmem>>, %arg6: memref<32x64xbf16, #tpu.memory_space<vmem>>, %arg7: memref<32x1xf32, #tpu.memory_space<vmem>>, %arg8: memref<96x32xbf16, #tpu.memory_space<vmem>>, %arg9: memref<96x1xf32, #tpu.memory_space<vmem>>, %arg10: memref<24x96xbf16, #tpu.memory_space<vmem>>, %arg11: memref<24x1xf32, #tpu.memory_space<vmem>>, %arg12: memref<24x128xf32, #tpu.memory_space<vmem>>) attributes {dimension_semantics = [#tpu.dimension_semantics<parallel>], iteration_bounds = array<i64: 1>, scalar_prefetch = 0 : i64, scratch_operands = 0 : i64, tpu.core_type = #tpu.core_type<tc>, window_params = [{transform_indices = @transform_0, window_bounds = array<i64: 16, 128>}, {pipeline_mode = #tpu.pipeline_mode<synchronous>, transform_indices = @transform_1, window_bounds = array<i64: 32, 16>}, {pipeline_mode = #tpu.pipeline_mode<synchronous>, transform_indices = @transform_2, window_bounds = array<i64: 32, 1>}, {pipeline_mode = #tpu.pipeline_mode<synchronous>, transform_indices = @transform_3, window_bounds = array<i64: 64, 32>}, {pipeline_mode = #tpu.pipeline_mode<synchronous>, transform_indices = @transform_4, window_bounds = array<i64: 64, 1>}, {pipeline_mode = #tpu.pipeline_mode<synchronous>, transform_indices = @transform_5, window_bounds = array<i64: 32, 64>}, {pipeline_mode = #tpu.pipeline_mode<synchronous>, transform_indices = @transform_6, window_bounds = array<i64: 32, 1>}, {pipeline_mode = #tpu.pipeline_mode<synchronous>, transform_indices = @transform_7, window_bounds = array<i64: 96, 32>}, {pipeline_mode = #tpu.pipeline_mode<synchronous>, transform_indices = @transform_8, window_bounds = array<i64: 96, 1>}, {pipeline_mode = #tpu.pipeline_mode<synchronous>, transform_indices = @transform_9, window_bounds = array<i64: 24, 96>}, {pipeline_mode = #tpu.pipeline_mode<synchronous>, transform_indices = @transform_10, window_bounds = array<i64: 24, 1>}, {transform_indices = @transform_11, window_bounds = array<i64: 24, 128>}]} {
    %c0 = arith.constant 0 : index
    %c0_0 = arith.constant 0 : index
    %0 = vector.load %arg1[%c0, %c0_0] : memref<16x128xf32, #tpu.memory_space<vmem>>, vector<16x128xf32>
    %1 = arith.truncf %0 : vector<16x128xf32> to vector<16x128xbf16>
    %c0_1 = arith.constant 0 : index
    %c0_2 = arith.constant 0 : index
    %2 = vector.load %arg2[%c0_1, %c0_2] : memref<32x16xbf16, #tpu.memory_space<vmem>>, vector<32x16xbf16>
    %cst = arith.constant dense<0.000000e+00> : vector<32x128xf32>
    %3 = tpu.matmul %2, %1, %cst {dimension_numbers = #tpu.dot_dimension_numbers<[1], [0], [0], [1], [0, 0, 1, 1], [], []>} : vector<32x16xbf16>, vector<16x128xbf16>, vector<32x128xf32> -> vector<32x128xf32>
    %c0_3 = arith.constant 0 : index
    %c0_4 = arith.constant 0 : index
    %4 = vector.load %arg3[%c0_3, %c0_4] : memref<32x1xf32, #tpu.memory_space<vmem>>, vector<32x1xf32>
    %5 = vector.broadcast %4 : vector<32x1xf32> to vector<32x128xf32>
    %6 = arith.addf %3, %5 : vector<32x128xf32>
    %cst_5 = arith.constant 0.000000e+00 : f32
    %7 = vector.broadcast %cst_5 : f32 to vector<32x128xf32>
    %8 = arith.maximumf %6, %7 : vector<32x128xf32>
    %c0_6 = arith.constant 0 : index
    %c0_7 = arith.constant 0 : index
    %9 = vector.load %arg4[%c0_6, %c0_7] : memref<64x32xbf16, #tpu.memory_space<vmem>>, vector<64x32xbf16>
    %10 = arith.truncf %8 : vector<32x128xf32> to vector<32x128xbf16>
    %cst_8 = arith.constant dense<0.000000e+00> : vector<64x128xf32>
    %11 = tpu.matmul %9, %10, %cst_8 {dimension_numbers = #tpu.dot_dimension_numbers<[1], [0], [0], [1], [0, 0, 1, 1], [], []>} : vector<64x32xbf16>, vector<32x128xbf16>, vector<64x128xf32> -> vector<64x128xf32>
    %c0_9 = arith.constant 0 : index
    %c0_10 = arith.constant 0 : index
    %12 = vector.load %arg5[%c0_9, %c0_10] : memref<64x1xf32, #tpu.memory_space<vmem>>, vector<64x1xf32>
    %13 = vector.broadcast %12 : vector<64x1xf32> to vector<64x128xf32>
    %14 = arith.addf %11, %13 : vector<64x128xf32>
    %cst_11 = arith.constant 0.000000e+00 : f32
    %15 = vector.broadcast %cst_11 : f32 to vector<64x128xf32>
    %16 = arith.maximumf %14, %15 : vector<64x128xf32>
    %c0_12 = arith.constant 0 : index
    %c0_13 = arith.constant 0 : index
    %17 = vector.load %arg6[%c0_12, %c0_13] : memref<32x64xbf16, #tpu.memory_space<vmem>>, vector<32x64xbf16>
    %18 = arith.truncf %16 : vector<64x128xf32> to vector<64x128xbf16>
    %cst_14 = arith.constant dense<0.000000e+00> : vector<32x128xf32>
    %19 = tpu.matmul %17, %18, %cst_14 {dimension_numbers = #tpu.dot_dimension_numbers<[1], [0], [0], [1], [0, 0, 1, 1], [], []>} : vector<32x64xbf16>, vector<64x128xbf16>, vector<32x128xf32> -> vector<32x128xf32>
    %c0_15 = arith.constant 0 : index
    %c0_16 = arith.constant 0 : index
    %20 = vector.load %arg7[%c0_15, %c0_16] : memref<32x1xf32, #tpu.memory_space<vmem>>, vector<32x1xf32>
    %21 = vector.broadcast %20 : vector<32x1xf32> to vector<32x128xf32>
    %22 = arith.addf %19, %21 : vector<32x128xf32>
    %cst_17 = arith.constant 0.000000e+00 : f32
    %23 = vector.broadcast %cst_17 : f32 to vector<32x128xf32>
    %24 = arith.maximumf %22, %23 : vector<32x128xf32>
    %c0_18 = arith.constant 0 : index
    %c0_19 = arith.constant 0 : index
    %25 = vector.load %arg8[%c0_18, %c0_19] : memref<96x32xbf16, #tpu.memory_space<vmem>>, vector<96x32xbf16>
    %26 = arith.truncf %24 : vector<32x128xf32> to vector<32x128xbf16>
    %cst_20 = arith.constant dense<0.000000e+00> : vector<96x128xf32>
    %27 = tpu.matmul %25, %26, %cst_20 {dimension_numbers = #tpu.dot_dimension_numbers<[1], [0], [0], [1], [0, 0, 1, 1], [], []>} : vector<96x32xbf16>, vector<32x128xbf16>, vector<96x128xf32> -> vector<96x128xf32>
    %c0_21 = arith.constant 0 : index
    %c0_22 = arith.constant 0 : index
    %28 = vector.load %arg9[%c0_21, %c0_22] : memref<96x1xf32, #tpu.memory_space<vmem>>, vector<96x1xf32>
    %29 = vector.broadcast %28 : vector<96x1xf32> to vector<96x128xf32>
    %30 = arith.addf %27, %29 : vector<96x128xf32>
    %cst_23 = arith.constant 0.000000e+00 : f32
    %31 = vector.broadcast %cst_23 : f32 to vector<96x128xf32>
    %32 = arith.maximumf %30, %31 : vector<96x128xf32>
    %33 = vector.shape_cast %32 : vector<96x128xf32> to vector<3x32x128xf32>
    %cst_24 = arith.constant dense<0.000000e+00> : vector<3x128xf32>
    %34 = vector.multi_reduction <add>, %33, %cst_24 [1] : vector<3x32x128xf32> to vector<3x128xf32>
    %35 = vector.shape_cast %34 : vector<3x128xf32> to vector<3x1x128xf32>
    %cst_25 = arith.constant 3.200000e+01 : f32
    %36 = vector.broadcast %cst_25 : f32 to vector<3x1x128xf32>
    %37 = arith.divf %35, %36 : vector<3x1x128xf32>
    %38 = vector.broadcast %37 : vector<3x1x128xf32> to vector<3x32x128xf32>
    %39 = arith.subf %33, %38 : vector<3x32x128xf32>
    %40 = arith.mulf %39, %39 : vector<3x32x128xf32>
    %cst_26 = arith.constant dense<0.000000e+00> : vector<3x128xf32>
    %41 = vector.multi_reduction <add>, %40, %cst_26 [1] : vector<3x32x128xf32> to vector<3x128xf32>
    %42 = vector.shape_cast %41 : vector<3x128xf32> to vector<3x1x128xf32>
    %cst_27 = arith.constant 3.200000e+01 : f32
    %43 = vector.broadcast %cst_27 : f32 to vector<3x1x128xf32>
    %44 = arith.divf %42, %43 : vector<3x1x128xf32>
    %cst_28 = arith.constant 9.99999974E-6 : f32
    %45 = vector.broadcast %cst_28 : f32 to vector<3x1x128xf32>
    %46 = arith.addf %44, %45 : vector<3x1x128xf32>
    %47 = math.rsqrt %46 : vector<3x1x128xf32>
    %48 = vector.broadcast %47 : vector<3x1x128xf32> to vector<3x32x128xf32>
    %49 = arith.mulf %39, %48 : vector<3x32x128xf32>
    %50 = vector.shape_cast %49 : vector<3x32x128xf32> to vector<96x128xf32>
    %c0_29 = arith.constant 0 : index
    %c0_30 = arith.constant 0 : index
    %51 = vector.load %arg10[%c0_29, %c0_30] : memref<24x96xbf16, #tpu.memory_space<vmem>>, vector<24x96xbf16>
    %52 = arith.truncf %50 : vector<96x128xf32> to vector<96x128xbf16>
    %cst_31 = arith.constant dense<0.000000e+00> : vector<24x128xf32>
    %53 = tpu.matmul %51, %52, %cst_31 {dimension_numbers = #tpu.dot_dimension_numbers<[1], [0], [0], [1], [0, 0, 1, 1], [], []>} : vector<24x96xbf16>, vector<96x128xbf16>, vector<24x128xf32> -> vector<24x128xf32>
    %c0_32 = arith.constant 0 : index
    %c0_33 = arith.constant 0 : index
    %54 = vector.load %arg11[%c0_32, %c0_33] : memref<24x1xf32, #tpu.memory_space<vmem>>, vector<24x1xf32>
    %55 = vector.broadcast %54 : vector<24x1xf32> to vector<24x128xf32>
    %56 = arith.addf %53, %55 : vector<24x128xf32>
    %57 = vector.shape_cast %56 : vector<24x128xf32> to vector<3x8x128xf32>
    %cst_34 = arith.constant dense<0xFF800000> : vector<3x128xf32>
    %58 = vector.multi_reduction <maximumf>, %57, %cst_34 [1] : vector<3x8x128xf32> to vector<3x128xf32>
    %59 = vector.shape_cast %58 : vector<3x128xf32> to vector<3x1x128xf32>
    %60 = vector.broadcast %59 : vector<3x1x128xf32> to vector<3x8x128xf32>
    %61 = arith.subf %57, %60 : vector<3x8x128xf32>
    %62 = math.exp %61 : vector<3x8x128xf32>
    %cst_35 = arith.constant dense<0.000000e+00> : vector<3x128xf32>
    %63 = vector.multi_reduction <add>, %62, %cst_35 [1] : vector<3x8x128xf32> to vector<3x128xf32>
    %64 = vector.shape_cast %63 : vector<3x128xf32> to vector<3x1x128xf32>
    %65 = tpu.reciprocal %64 {approx = true} : vector<3x1x128xf32> -> vector<3x1x128xf32>
    %66 = vector.broadcast %65 : vector<3x1x128xf32> to vector<3x8x128xf32>
    %67 = arith.mulf %62, %66 : vector<3x8x128xf32>
    %68 = vector.shape_cast %67 : vector<3x8x128xf32> to vector<24x128xf32>
    %c0_36 = arith.constant 0 : index
    %c0_37 = arith.constant 0 : index
    %69 = vector.load %arg12[%c0_36, %c0_37] : memref<24x128xf32, #tpu.memory_space<vmem>>, vector<24x128xf32>
    tpu.vector_store %arg12[%c0_36, %c0_37], %68 {strides = array<i32>} : memref<24x128xf32, #tpu.memory_space<vmem>>, vector<24x128xf32>,
    return
  }
  func.func @transform_0(%arg0: i32) -> (i32, i32) {
    %c0_i32 = arith.constant 0 : i32
    %c0_i32_0 = arith.constant 0 : i32
    return %c0_i32, %arg0 : i32, i32
  }
  func.func @transform_1(%arg0: i32) -> (i32, i32) {
    %c0_i32 = arith.constant 0 : i32
    %c0_i32_0 = arith.constant 0 : i32
    %c0_i32_1 = arith.constant 0 : i32
    return %c0_i32, %c0_i32_0 : i32, i32
  }
  func.func @transform_2(%arg0: i32) -> (i32, i32) {
    %c0_i32 = arith.constant 0 : i32
    %c0_i32_0 = arith.constant 0 : i32
    %c0_i32_1 = arith.constant 0 : i32
    return %c0_i32, %c0_i32_0 : i32, i32
  }
  func.func @transform_3(%arg0: i32) -> (i32, i32) {
    %c0_i32 = arith.constant 0 : i32
    %c0_i32_0 = arith.constant 0 : i32
    %c0_i32_1 = arith.constant 0 : i32
    return %c0_i32, %c0_i32_0 : i32, i32
  }
  func.func @transform_4(%arg0: i32) -> (i32, i32) {
    %c0_i32 = arith.constant 0 : i32
    %c0_i32_0 = arith.constant 0 : i32
    %c0_i32_1 = arith.constant 0 : i32
    return %c0_i32, %c0_i32_0 : i32, i32
  }
  func.func @transform_5(%arg0: i32) -> (i32, i32) {
    %c0_i32 = arith.constant 0 : i32
    %c0_i32_0 = arith.constant 0 : i32
    %c0_i32_1 = arith.constant 0 : i32
    return %c0_i32, %c0_i32_0 : i32, i32
  }
  func.func @transform_6(%arg0: i32) -> (i32, i32) {
    %c0_i32 = arith.constant 0 : i32
    %c0_i32_0 = arith.constant 0 : i32
    %c0_i32_1 = arith.constant 0 : i32
    return %c0_i32, %c0_i32_0 : i32, i32
  }
  func.func @transform_7(%arg0: i32) -> (i32, i32) {
    %c0_i32 = arith.constant 0 : i32
    %c0_i32_0 = arith.constant 0 : i32
    %c0_i32_1 = arith.constant 0 : i32
    return %c0_i32, %c0_i32_0 : i32, i32
  }
  func.func @transform_8(%arg0: i32) -> (i32, i32) {
    %c0_i32 = arith.constant 0 : i32
    %c0_i32_0 = arith.constant 0 : i32
    %c0_i32_1 = arith.constant 0 : i32
    return %c0_i32, %c0_i32_0 : i32, i32
  }
  func.func @transform_9(%arg0: i32) -> (i32, i32) {
    %c0_i32 = arith.constant 0 : i32
    %c0_i32_0 = arith.constant 0 : i32
    %c0_i32_1 = arith.constant 0 : i32
    return %c0_i32, %c0_i32_0 : i32, i32
  }
  func.func @transform_10(%arg0: i32) -> (i32, i32) {
    %c0_i32 = arith.constant 0 : i32
    %c0_i32_0 = arith.constant 0 : i32
    %c0_i32_1 = arith.constant 0 : i32
    return %c0_i32, %c0_i32_0 : i32, i32
  }
  func.func @transform_11(%arg0: i32) -> (i32, i32) {
    %c0_i32 = arith.constant 0 : i32
    %c0_i32_0 = arith.constant 0 : i32
    return %c0_i32, %arg0 : i32, i32
  }
}

</mosaic_0001>

<llo_original>
// kernel: my_dqn_forward.1
$region0: #{my_dqn_forward.1}
  #allocation0 [shape = 'u32[]', space=smem, size = 0x4, offset = 0x4, fixed_abs, tag = 'smem constant byte address 0x4 - core index']
  #allocation1 [shape = 'u32[72,128]{1,0:T(1,128)}', space=vmem, size = 0x9000, scoped, tag = 'internal scratch']
  %s0 = inlined_call_operand.vmem [shape: f32[16,128], index: 0, kind: input, shape index: {}]
  %s1 = inlined_call_operand.vmem [shape: bf16[32,16], index: 1, kind: input, shape index: {}]
  %s2 = inlined_call_operand.vmem [shape: f32[32,1], index: 2, kind: input, shape index: {}]
  %s3 = inlined_call_operand.vmem [shape: bf16[64,32], index: 3, kind: input, shape index: {}]
  %s4 = inlined_call_operand.vmem [shape: f32[64,1], index: 4, kind: input, shape index: {}]
  %s5 = inlined_call_operand.vmem [shape: bf16[32,64], index: 5, kind: input, shape index: {}]
  %s6 = inlined_call_operand.vmem [shape: f32[32,1], index: 6, kind: input, shape index: {}]
  %s7 = inlined_call_operand.vmem [shape: bf16[96,32], index: 7, kind: input, shape index: {}]
  %s8 = inlined_call_operand.vmem [shape: f32[96,1], index: 8, kind: input, shape index: {}]
  %s9 = inlined_call_operand.vmem [shape: bf16[24,96], index: 9, kind: input, shape index: {}]
  %s10 = inlined_call_operand.vmem [shape: f32[24,1], index: 10, kind: input, shape index: {}]
  %s11 = inlined_call_operand.vmem [shape: f32[24,128], index: 11, kind: output, shape index: {}]
  %s12 = sld [smem:[#allocation0]]
  $region54: #{my_dqn_forward.1} parent=0
    _
  %s14 = ssub.s32 1, %s12
  %s15 = scalar_select 0, %s14, %s12
  // Predicated region
  $region2: #{my_dqn_forward.1} parent=0 // pred_check
    _
  $region3: #{my_dqn_forward.1} parent=0 // pred_check_branch
    %17 = sbr.rel (0) target = $region5
  $region4: #{my_dqn_forward.1} parent=0 // pred_region
    _
  $region5: #{my_dqn_forward.1} parent=0 // pred_fallthru
    _
  // Predicated region
  $region6: #{my_dqn_forward.1} parent=0 // pred_check
    _
  $region7: #{my_dqn_forward.1} parent=0 // pred_check_branch
    %19 = sbr.rel (0) target = $region9
  $region8: #{my_dqn_forward.1} parent=0 // pred_region
    _
  $region9: #{my_dqn_forward.1} parent=0 // pred_fallthru
    _
  // Predicated region
  $region10: #{my_dqn_forward.1} parent=0 // pred_check
    _
  $region11: #{my_dqn_forward.1} parent=0 // pred_check_branch
    %21 = sbr.rel (0) target = $region13
  $region12: #{my_dqn_forward.1} parent=0 // pred_region
    _
  $region13: #{my_dqn_forward.1} parent=0 // pred_fallthru
    _
  // Predicated region
  $region14: #{my_dqn_forward.1} parent=0 // pred_check
    _
  $region15: #{my_dqn_forward.1} parent=0 // pred_check_branch
    %23 = sbr.rel (0) target = $region17
  $region16: #{my_dqn_forward.1} parent=0 // pred_region
    _
  $region17: #{my_dqn_forward.1} parent=0 // pred_fallthru
    _
  // Predicated region
  $region18: #{my_dqn_forward.1} parent=0 // pred_check
    _
  $region19: #{my_dqn_forward.1} parent=0 // pred_check_branch
    %25 = sbr.rel (0) target = $region21
  $region20: #{my_dqn_forward.1} parent=0 // pred_region
    _
  $region21: #{my_dqn_forward.1} parent=0 // pred_fallthru
    _
  // Predicated region
  $region22: #{my_dqn_forward.1} parent=0 // pred_check
    _
  $region23: #{my_dqn_forward.1} parent=0 // pred_check_branch
    %27 = sbr.rel (0) target = $region25
  $region24: #{my_dqn_forward.1} parent=0 // pred_region
    _
  $region25: #{my_dqn_forward.1} parent=0 // pred_fallthru
    _
  // Predicated region
  $region26: #{my_dqn_forward.1} parent=0 // pred_check
    _
  $region27: #{my_dqn_forward.1} parent=0 // pred_check_branch
    %29 = sbr.rel (0) target = $region29
  $region28: #{my_dqn_forward.1} parent=0 // pred_region
    _
  $region29: #{my_dqn_forward.1} parent=0 // pred_fallthru
    _
  // Predicated region
  $region30: #{my_dqn_forward.1} parent=0 // pred_check
    _
  $region31: #{my_dqn_forward.1} parent=0 // pred_check_branch
    %31 = sbr.rel (0) target = $region33
  $region32: #{my_dqn_forward.1} parent=0 // pred_region
    _
  $region33: #{my_dqn_forward.1} parent=0 // pred_fallthru
    _
  // Predicated region
  $region34: #{my_dqn_forward.1} parent=0 // pred_check
    _
  $region35: #{my_dqn_forward.1} parent=0 // pred_check_branch
    %33 = sbr.rel (0) target = $region37
  $region36: #{my_dqn_forward.1} parent=0 // pred_region
    _
  $region37: #{my_dqn_forward.1} parent=0 // pred_fallthru
    _
  // Predicated region
  $region38: #{my_dqn_forward.1} parent=0 // pred_check
    _
  $region39: #{my_dqn_forward.1} parent=0 // pred_check_branch
    %35 = sbr.rel (0) target = $region41
  $region40: #{my_dqn_forward.1} parent=0 // pred_region
    _
  $region41: #{my_dqn_forward.1} parent=0 // pred_fallthru
    _
  // Predicated region
  $region42: #{my_dqn_forward.1} parent=0 // pred_check
    _
  $region43: #{my_dqn_forward.1} parent=0 // pred_check_branch
    %37 = sbr.rel (0) target = $region45
  $region44: #{my_dqn_forward.1} parent=0 // pred_region
    _
  $region45: #{my_dqn_forward.1} parent=0 // pred_fallthru
    _
  %v39 = vld [vmem:[%s0] sm:$0xff]
  %v40 = vld [vmem:[%s0 + $0x8] sm:$0xff]
  %v41 = vpack.c.bf16 %v40, %v39
  %v42 = vld [vmem:[%s1] sm:$0xf]
  %v43 = vld [vmem:[%s1 + $0x4] sm:$0xf]
  %v44 = vld [vmem:[%s1 + $0x8] sm:$0xf]
  %v45 = vld [vmem:[%s1 + $0xc] sm:$0xf]
  %v46 = vld [vmem:[%s2] sm:$0xff]
  %v47 = vld [vmem:[%s2 + $0x8] sm:$0xff]
  %v48 = vld [vmem:[%s2 + $0x10] sm:$0xff]
  %v49 = vld [vmem:[%s2 + $0x18] sm:$0xff]
  %51 = vset.pattern.permute.xlu0 0
  %52 = vperm.xlu0 %51, %v46
  %v53 = vpop.permute.xlu0 %52
  %56 = vset.pattern.permute.xlu0 0
  %57 = vperm.xlu0 %56, %v47
  %v58 = vpop.permute.xlu0 %57
  %61 = vset.pattern.permute.xlu0 0
  %62 = vperm.xlu0 %61, %v48
  %v63 = vpop.permute.xlu0 %62
  %66 = vset.pattern.permute.xlu0 0
  %67 = vperm.xlu0 %66, %v49
  %v68 = vpop.permute.xlu0 %67
  %v74 = vunpack.c.l.b16 %v42
  %v75 = vunpack.c.l.b16 %v43
  %v76 = vunpack.c.l.b16 %v44
  %v77 = vunpack.c.l.b16 %v45
  %v78 = vpack.c.b16 %v75, %v74
  %v79 = vpack.c.b16 %v77, %v76
  %vm80 = vcmask 130048
  %v82 = vsel %vm80, %v78, 0
  %v85 = vsel %vm80, %v79, 0
  %87 = vmatpush.bf16.msra.mxu0 0
  %88 = vmatpush.bf16.msra.mxu0 0
  %89 = vmatpush.bf16.msra.mxu0 0
  %90 = vmatpush.bf16.msra.mxu0 0
  %91 = vmatpush.bf16.msra.mxu0 0
  %92 = vmatpush.bf16.msra.mxu0 0
  %93 = vmatpush.bf16.msra.mxu0 0
  %94 = vmatpush.bf16.msra.mxu0 %v41
  %95 = vmatmul.bf16.gmra.mxu0 %v82
  %v96 = vpop.f32.mrf.mxu0
  %v97 = vadd.f32 %v53, %v96
  %v98 = vpop.f32.mrf.mxu0
  %v99 = vadd.f32 %v58, %v98
  %100 = vmatmul.bf16.gmra.mxu0 %v85
  %v101 = vpop.f32.mrf.mxu0
  %v102 = vadd.f32 %v63, %v101
  %v103 = vpop.f32.mrf.mxu0
  %v104 = vadd.f32 %v68, %v103
  %105 = vdwg.mxu0
  %v106 = vmax.f32 %v97, 0.0
  %v107 = vmax.f32 %v99, 0.0
  %v108 = vmax.f32 %v102, 0.0
  %v109 = vmax.f32 %v104, 0.0
  %v110 = vld [vmem:[%s3] sm:$0xf]
  %v111 = vld [vmem:[%s3 + $0x4] sm:$0xf]
  %v112 = vld [vmem:[%s3 + $0x8] sm:$0xf]
  %v113 = vld [vmem:[%s3 + $0xc] sm:$0xf]
  %v114 = vld [vmem:[%s3 + $0x10] sm:$0xf]
  %v115 = vld [vmem:[%s3 + $0x14] sm:$0xf]
  %v116 = vld [vmem:[%s3 + $0x18] sm:$0xf]
  %v117 = vld [vmem:[%s3 + $0x1c] sm:$0xf]
  %v118 = vpack.c.bf16 %v107, %v106
  %v119 = vpack.c.bf16 %v109, %v108
  %v120 = vld [vmem:[%s4] sm:$0xff]
  %v121 = vld [vmem:[%s4 + $0x8] sm:$0xff]
  %v122 = vld [vmem:[%s4 + $0x10] sm:$0xff]
  %v123 = vld [vmem:[%s4 + $0x18] sm:$0xff]
  %v124 = vld [vmem:[%s4 + $0x20] sm:$0xff]
  %v125 = vld [vmem:[%s4 + $0x28] sm:$0xff]
  %v126 = vld [vmem:[%s4 + $0x30] sm:$0xff]
  %v127 = vld [vmem:[%s4 + $0x38] sm:$0xff]
  %129 = vset.pattern.permute.xlu0 0
  %130 = vperm.xlu0 %129, %v120
  %v131 = vpop.permute.xlu0 %130
  %134 = vset.pattern.permute.xlu0 0
  %135 = vperm.xlu0 %134, %v121
  %v136 = vpop.permute.xlu0 %135
  %139 = vset.pattern.permute.xlu0 0
  %140 = vperm.xlu0 %139, %v122
  %v141 = vpop.permute.xlu0 %140
  %144 = vset.pattern.permute.xlu0 0
  %145 = vperm.xlu0 %144, %v123
  %v146 = vpop.permute.xlu0 %145
  %149 = vset.pattern.permute.xlu0 0
  %150 = vperm.xlu0 %149, %v124
  %v151 = vpop.permute.xlu0 %150
  %154 = vset.pattern.permute.xlu0 0
  %155 = vperm.xlu0 %154, %v125
  %v156 = vpop.permute.xlu0 %155
  %159 = vset.pattern.permute.xlu0 0
  %160 = vperm.xlu0 %159, %v126
  %v161 = vpop.permute.xlu0 %160
  %164 = vset.pattern.permute.xlu0 0
  %165 = vperm.xlu0 %164, %v127
  %v166 = vpop.permute.xlu0 %165
  %v176 = vunpack.c.l.b16 %v110
  %v177 = vunpack.c.l.b16 %v111
  %v178 = vunpack.c.l.b16 %v112
  %v179 = vunpack.c.l.b16 %v113
  %v180 = vunpack.c.l.b16 %v114
  %v181 = vunpack.c.l.b16 %v115
  %v182 = vunpack.c.l.b16 %v116
  %v183 = vunpack.c.l.b16 %v117
  %v184 = vpack.c.b16 %v177, %v176
  %v185 = vpack.c.b16 %v179, %v178
  %v186 = vpack.c.b16 %v181, %v180
  %v187 = vpack.c.b16 %v183, %v182
  %vm188 = vcmask 261120
  %v190 = vsel %vm188, %v184, 0
  %v193 = vsel %vm188, %v185, 0
  %v196 = vsel %vm188, %v186, 0
  %v199 = vsel %vm188, %v187, 0
  %201 = vmatpush.bf16.msra.mxu0 0
  %202 = vmatpush.bf16.msra.mxu0 0
  %203 = vmatpush.bf16.msra.mxu0 0
  %204 = vmatpush.bf16.msra.mxu0 0
  %205 = vmatpush.bf16.msra.mxu0 0
  %206 = vmatpush.bf16.msra.mxu0 0
  %207 = vmatpush.bf16.msra.mxu0 %v119
  %208 = vmatpush.bf16.msra.mxu0 %v118
  %209 = vmatmul.bf16.gmra.mxu0 %v190
  %v210 = vpop.f32.mrf.mxu0
  %v211 = vadd.f32 %v131, %v210
  %v212 = vpop.f32.mrf.mxu0
  %v213 = vadd.f32 %v136, %v212
  %214 = vmatmul.bf16.gmra.mxu0 %v193
  %v215 = vpop.f32.mrf.mxu0
  %v216 = vadd.f32 %v141, %v215
  %v217 = vpop.f32.mrf.mxu0
  %v218 = vadd.f32 %v146, %v217
  %219 = vmatmul.bf16.gmra.mxu0 %v196
  %v220 = vpop.f32.mrf.mxu0
  %v221 = vadd.f32 %v151, %v220
  %v222 = vpop.f32.mrf.mxu0
  %v223 = vadd.f32 %v156, %v222
  %224 = vmatmul.bf16.gmra.mxu0 %v199
  %v225 = vpop.f32.mrf.mxu0
  %v226 = vadd.f32 %v161, %v225
  %v227 = vpop.f32.mrf.mxu0
  %v228 = vadd.f32 %v166, %v227
  %229 = vdwg.mxu0
  %v230 = vmax.f32 %v211, 0.0
  %v231 = vmax.f32 %v213, 0.0
  %v232 = vmax.f32 %v216, 0.0
  %v233 = vmax.f32 %v218, 0.0
  %v234 = vmax.f32 %v221, 0.0
  %v235 = vmax.f32 %v223, 0.0
  %v236 = vmax.f32 %v226, 0.0
  %v237 = vmax.f32 %v228, 0.0
  %v238 = vld [vmem:[%s5] sm:$0xf]
  %v239 = vld [vmem:[%s5 + $0x4] sm:$0xf]
  %v240 = vld [vmem:[%s5 + $0x8] sm:$0xf]
  %v241 = vld [vmem:[%s5 + $0xc] sm:$0xf]
  %v242 = vpack.c.bf16 %v231, %v230
  %v243 = vpack.c.bf16 %v233, %v232
  %v244 = vpack.c.bf16 %v235, %v234
  %v245 = vpack.c.bf16 %v237, %v236
  %v246 = vld [vmem:[%s6] sm:$0xff]
  %v247 = vld [vmem:[%s6 + $0x8] sm:$0xff]
  %v248 = vld [vmem:[%s6 + $0x10] sm:$0xff]
  %v249 = vld [vmem:[%s6 + $0x18] sm:$0xff]
  %251 = vset.pattern.permute.xlu0 0
  %252 = vperm.xlu0 %251, %v246
  %v253 = vpop.permute.xlu0 %252
  %256 = vset.pattern.permute.xlu0 0
  %257 = vperm.xlu0 %256, %v247
  %v258 = vpop.permute.xlu0 %257
  %261 = vset.pattern.permute.xlu0 0
  %262 = vperm.xlu0 %261, %v248
  %v263 = vpop.permute.xlu0 %262
  %266 = vset.pattern.permute.xlu0 0
  %267 = vperm.xlu0 %266, %v249
  %v268 = vpop.permute.xlu0 %267
  %v274 = vunpack.c.l.b16 %v238
  %v275 = vunpack.c.l.b16 %v239
  %v276 = vunpack.c.l.b16 %v240
  %v277 = vunpack.c.l.b16 %v241
  %v278 = vpack.c.b16 %v275, %v274
  %v279 = vpack.c.b16 %v277, %v276
  %vm280 = vcmask 523264
  %v282 = vsel %vm280, %v278, 0
  %v285 = vsel %vm280, %v279, 0
  %287 = vmatpush.bf16.msra.mxu0 0
  %288 = vmatpush.bf16.msra.mxu0 0
  %289 = vmatpush.bf16.msra.mxu0 0
  %290 = vmatpush.bf16.msra.mxu0 0
  %291 = vmatpush.bf16.msra.mxu0 %v245
  %292 = vmatpush.bf16.msra.mxu0 %v244
  %293 = vmatpush.bf16.msra.mxu0 %v243
  %294 = vmatpush.bf16.msra.mxu0 %v242
  %295 = vmatmul.bf16.gmra.mxu0 %v282
  %v296 = vpop.f32.mrf.mxu0
  %v297 = vadd.f32 %v253, %v296
  %v298 = vpop.f32.mrf.mxu0
  %v299 = vadd.f32 %v258, %v298
  %300 = vmatmul.bf16.gmra.mxu0 %v285
  %v301 = vpop.f32.mrf.mxu0
  %v302 = vadd.f32 %v263, %v301
  %v303 = vpop.f32.mrf.mxu0
  %v304 = vadd.f32 %v268, %v303
  %305 = vdwg.mxu0
  %v306 = vmax.f32 %v297, 0.0
  %v307 = vmax.f32 %v299, 0.0
  %v308 = vmax.f32 %v302, 0.0
  %v309 = vmax.f32 %v304, 0.0
  %v310 = vld [vmem:[%s7] sm:$0xf]
  %v311 = vld [vmem:[%s7 + $0x4] sm:$0xf]
  %v312 = vld [vmem:[%s7 + $0x8] sm:$0xf]
  %v313 = vld [vmem:[%s7 + $0xc] sm:$0xf]
  %v314 = vld [vmem:[%s7 + $0x10] sm:$0xf]
  %v315 = vld [vmem:[%s7 + $0x14] sm:$0xf]
  %v316 = vld [vmem:[%s7 + $0x18] sm:$0xf]
  %v317 = vld [vmem:[%s7 + $0x1c] sm:$0xf]
  %v318 = vld [vmem:[%s7 + $0x20] sm:$0xf]
  %v319 = vld [vmem:[%s7 + $0x24] sm:$0xf]
  %v320 = vld [vmem:[%s7 + $0x28] sm:$0xf]
  %v321 = vld [vmem:[%s7 + $0x2c] sm:$0xf]
  %v322 = vpack.c.bf16 %v307, %v306
  %v323 = vpack.c.bf16 %v309, %v308
  %v324 = vld [vmem:[%s8] sm:$0xff]
  %v325 = vld [vmem:[%s8 + $0x8] sm:$0xff]
  %v326 = vld [vmem:[%s8 + $0x10] sm:$0xff]
  %v327 = vld [vmem:[%s8 + $0x18] sm:$0xff]
  %v328 = vld [vmem:[%s8 + $0x20] sm:$0xff]
  %v329 = vld [vmem:[%s8 + $0x28] sm:$0xff]
  %v330 = vld [vmem:[%s8 + $0x30] sm:$0xff]
  %v331 = vld [vmem:[%s8 + $0x38] sm:$0xff]
  %v332 = vld [vmem:[%s8 + $0x40] sm:$0xff]
  %v333 = vld [vmem:[%s8 + $0x48] sm:$0xff]
  %v334 = vld [vmem:[%s8 + $0x50] sm:$0xff]
  %v335 = vld [vmem:[%s8 + $0x58] sm:$0xff]
  %337 = vset.pattern.permute.xlu0 0
  %338 = vperm.xlu0 %337, %v324
  %v339 = vpop.permute.xlu0 %338
  %342 = vset.pattern.permute.xlu0 0
  %343 = vperm.xlu0 %342, %v325
  %v344 = vpop.permute.xlu0 %343
  %347 = vset.pattern.permute.xlu0 0
  %348 = vperm.xlu0 %347, %v326
  %v349 = vpop.permute.xlu0 %348
  %352 = vset.pattern.permute.xlu0 0
  %353 = vperm.xlu0 %352, %v327
  %v354 = vpop.permute.xlu0 %353
  %357 = vset.pattern.permute.xlu0 0
  %358 = vperm.xlu0 %357, %v328
  %v359 = vpop.permute.xlu0 %358
  %362 = vset.pattern.permute.xlu0 0
  %363 = vperm.xlu0 %362, %v329
  %v364 = vpop.permute.xlu0 %363
  %367 = vset.pattern.permute.xlu0 0
  %368 = vperm.xlu0 %367, %v330
  %v369 = vpop.permute.xlu0 %368
  %372 = vset.pattern.permute.xlu0 0
  %373 = vperm.xlu0 %372, %v331
  %v374 = vpop.permute.xlu0 %373
  %377 = vset.pattern.permute.xlu0 0
  %378 = vperm.xlu0 %377, %v332
  %v379 = vpop.permute.xlu0 %378
  %382 = vset.pattern.permute.xlu0 0
  %383 = vperm.xlu0 %382, %v333
  %v384 = vpop.permute.xlu0 %383
  %387 = vset.pattern.permute.xlu0 0
  %388 = vperm.xlu0 %387, %v334
  %v389 = vpop.permute.xlu0 %388
  %392 = vset.pattern.permute.xlu0 0
  %393 = vperm.xlu0 %392, %v335
  %v394 = vpop.permute.xlu0 %393
  %v408 = vunpack.c.l.b16 %v310
  %v409 = vunpack.c.l.b16 %v311
  %v410 = vunpack.c.l.b16 %v312
  %v411 = vunpack.c.l.b16 %v313
  %v412 = vunpack.c.l.b16 %v314
  %v413 = vunpack.c.l.b16 %v315
  %v414 = vunpack.c.l.b16 %v316
  %v415 = vunpack.c.l.b16 %v317
  %v416 = vunpack.c.l.b16 %v318
  %v417 = vunpack.c.l.b16 %v319
  %v418 = vunpack.c.l.b16 %v320
  %v419 = vunpack.c.l.b16 %v321
  %v420 = vpack.c.b16 %v409, %v408
  %v421 = vpack.c.b16 %v411, %v410
  %v422 = vpack.c.b16 %v413, %v412
  %v423 = vpack.c.b16 %v415, %v414
  %v424 = vpack.c.b16 %v417, %v416
  %v425 = vpack.c.b16 %v419, %v418
  %v427 = vsel %vm188, %v420, 0
  %v430 = vsel %vm188, %v421, 0
  %v433 = vsel %vm188, %v422, 0
  %v436 = vsel %vm188, %v423, 0
  %v439 = vsel %vm188, %v424, 0
  %v442 = vsel %vm188, %v425, 0
  %444 = vmatpush.bf16.msra.mxu0 0
  %445 = vmatpush.bf16.msra.mxu0 0
  %446 = vmatpush.bf16.msra.mxu0 0
  %447 = vmatpush.bf16.msra.mxu0 0
  %448 = vmatpush.bf16.msra.mxu0 0
  %449 = vmatpush.bf16.msra.mxu0 0
  %450 = vmatpush.bf16.msra.mxu0 %v323
  %451 = vmatpush.bf16.msra.mxu0 %v322
  %452 = vmatmul.bf16.gmra.mxu0 %v427
  %v453 = vpop.f32.mrf.mxu0
  %v454 = vadd.f32 %v339, %v453
  %v455 = vpop.f32.mrf.mxu0
  %v456 = vadd.f32 %v344, %v455
  %457 = vmatmul.bf16.gmra.mxu0 %v430
  %v458 = vpop.f32.mrf.mxu0
  %v459 = vadd.f32 %v349, %v458
  %v460 = vpop.f32.mrf.mxu0
  %v461 = vadd.f32 %v354, %v460
  %462 = vmatmul.bf16.gmra.mxu0 %v433
  %v463 = vpop.f32.mrf.mxu0
  %v464 = vadd.f32 %v359, %v463
  %v465 = vpop.f32.mrf.mxu0
  %v466 = vadd.f32 %v364, %v465
  %467 = vmatmul.bf16.gmra.mxu0 %v436
  %v468 = vpop.f32.mrf.mxu0
  %v469 = vadd.f32 %v369, %v468
  %v470 = vpop.f32.mrf.mxu0
  %v471 = vadd.f32 %v374, %v470
  %472 = vmatmul.bf16.gmra.mxu0 %v439
  %v473 = vpop.f32.mrf.mxu0
  %v474 = vadd.f32 %v379, %v473
  %v475 = vpop.f32.mrf.mxu0
  %v476 = vadd.f32 %v384, %v475
  %477 = vmatmul.bf16.gmra.mxu0 %v442
  %v478 = vpop.f32.mrf.mxu0
  %v479 = vadd.f32 %v389, %v478
  %v480 = vpop.f32.mrf.mxu0
  %v481 = vadd.f32 %v394, %v480
  %482 = vdwg.mxu0
  %v483 = vmax.f32 %v454, 0.0
  %v484 = vmax.f32 %v456, 0.0
  %v485 = vmax.f32 %v459, 0.0
  %v486 = vmax.f32 %v461, 0.0
  %v487 = vmax.f32 %v464, 0.0
  %v488 = vmax.f32 %v466, 0.0
  %v489 = vmax.f32 %v469, 0.0
  %v490 = vmax.f32 %v471, 0.0
  %v491 = vmax.f32 %v474, 0.0
  %v492 = vmax.f32 %v476, 0.0
  %v493 = vmax.f32 %v479, 0.0
  %v494 = vmax.f32 %v481, 0.0
  %v495 = vadd.f32 %v483, %v484
  %v496 = vadd.f32 %v495, %v485
  %v497 = vadd.f32 %v496, %v486
  %v498 = vrot.slane %v497, 4
  %v499 = vadd.f32 %v497, %v498
  %v500 = vrot.slane %v499, 2
  %v501 = vadd.f32 %v499, %v500
  %v502 = vrot.slane %v501, 1
  %v503 = vadd.f32 %v501, %v502
  %v504 = vadd.f32 %v487, %v488
  %v505 = vadd.f32 %v504, %v489
  %v506 = vadd.f32 %v505, %v490
  %v507 = vrot.slane %v506, 4
  %v508 = vadd.f32 %v506, %v507
  %v509 = vrot.slane %v508, 2
  %v510 = vadd.f32 %v508, %v509
  %v511 = vrot.slane %v510, 1
  %v512 = vadd.f32 %v510, %v511
  %v513 = vadd.f32 %v491, %v492
  %v514 = vadd.f32 %v513, %v493
  %v515 = vadd.f32 %v514, %v494
  %v516 = vrot.slane %v515, 4
  %v517 = vadd.f32 %v515, %v516
  %v518 = vrot.slane %v517, 2
  %v519 = vadd.f32 %v517, %v518
  %v520 = vrot.slane %v519, 1
  %v521 = vadd.f32 %v519, %v520
  %v522 = vrcp.pop 32.0
  %v523 = vmul.f32 32.0, %v522
  %v524 = vsub.f32 1.0, %v523
  %v525 = vmul.f32 %v522, %v524
  %v526 = vadd.f32 %v522, %v525
  %vm527 = vweird.f32 %v522
  %v528 = vsel %vm527, %v522, %v526
  %v529 = vmul.f32 %v503, %v528
  %v530 = vmul.f32 %v512, %v528
  %v531 = vmul.f32 %v521, %v528
  %v532 = vsub.f32 %v483, %v529
  %v533 = vsub.f32 %v484, %v529
  %v534 = vsub.f32 %v485, %v529
  %v535 = vsub.f32 %v486, %v529
  %v536 = vsub.f32 %v487, %v530
  %v537 = vsub.f32 %v488, %v530
  %v538 = vsub.f32 %v489, %v530
  %v539 = vsub.f32 %v490, %v530
  %v540 = vsub.f32 %v491, %v531
  %v541 = vsub.f32 %v492, %v531
  %v542 = vsub.f32 %v493, %v531
  %v543 = vsub.f32 %v494, %v531
  %v544 = vmul.f32 %v532, %v532
  %v545 = vmul.f32 %v533, %v533
  %v546 = vmul.f32 %v534, %v534
  %v547 = vmul.f32 %v535, %v535
  %v548 = vmul.f32 %v536, %v536
  %v549 = vmul.f32 %v537, %v537
  %v550 = vmul.f32 %v538, %v538
  %v551 = vmul.f32 %v539, %v539
  %v552 = vmul.f32 %v540, %v540
  %v553 = vmul.f32 %v541, %v541
  %v554 = vmul.f32 %v542, %v542
  %v555 = vmul.f32 %v543, %v543
  %v556 = vadd.f32 %v544, %v545
  %v557 = vadd.f32 %v556, %v546
  %v558 = vadd.f32 %v557, %v547
  %v559 = vrot.slane %v558, 4
  %v560 = vadd.f32 %v558, %v559
  %v561 = vrot.slane %v560, 2
  %v562 = vadd.f32 %v560, %v561
  %v563 = vrot.slane %v562, 1
  %v564 = vadd.f32 %v562, %v563
  %v565 = vadd.f32 %v548, %v549
  %v566 = vadd.f32 %v565, %v550
  %v567 = vadd.f32 %v566, %v551
  %v568 = vrot.slane %v567, 4
  %v569 = vadd.f32 %v567, %v568
  %v570 = vrot.slane %v569, 2
  %v571 = vadd.f32 %v569, %v570
  %v572 = vrot.slane %v571, 1
  %v573 = vadd.f32 %v571, %v572
  %v574 = vadd.f32 %v552, %v553
  %v575 = vadd.f32 %v574, %v554
  %v576 = vadd.f32 %v575, %v555
  %v577 = vrot.slane %v576, 4
  %v578 = vadd.f32 %v576, %v577
  %v579 = vrot.slane %v578, 2
  %v580 = vadd.f32 %v578, %v579
  %v581 = vrot.slane %v580, 1
  %v582 = vadd.f32 %v580, %v581
  %v583 = vmul.f32 %v564, %v528
  %v584 = vmul.f32 %v573, %v528
  %v585 = vmul.f32 %v582, %v528
  %v586 = vadd.f32 %v583, 1e-05
  %v587 = vadd.f32 %v584, 1e-05
  %v588 = vadd.f32 %v585, 1e-05
  %v589 = vrsqrt.pop %v586
  %v590 = vmul.f32 %v589, %v586
  %v591 = vmul.f32 %v590, %v589
  %v592 = vmul.f32 0.5, %v591
  %v593 = vsub.f32 1.5, %v592
  %v594 = vmul.f32 %v589, %v593
  %vm595 = vweird.f32 %v586
  %vm596 = vweird.f32 %v589
  %vm597 = vmor %vm595, %vm596
  %v598 = vsel %vm597, %v589, %v594
  %v599 = vrsqrt.pop %v587
  %v600 = vmul.f32 %v599, %v587
  %v601 = vmul.f32 %v600, %v599
  %v602 = vmul.f32 0.5, %v601
  %v603 = vsub.f32 1.5, %v602
  %v604 = vmul.f32 %v599, %v603
  %vm605 = vweird.f32 %v587
  %vm606 = vweird.f32 %v599
  %vm607 = vmor %vm605, %vm606
  %v608 = vsel %vm607, %v599, %v604
  %v609 = vrsqrt.pop %v588
  %v610 = vmul.f32 %v609, %v588
  %v611 = vmul.f32 %v610, %v609
  %v612 = vmul.f32 0.5, %v611
  %v613 = vsub.f32 1.5, %v612
  %v614 = vmul.f32 %v609, %v613
  %vm615 = vweird.f32 %v588
  %vm616 = vweird.f32 %v609
  %vm617 = vmor %vm615, %vm616
  %v618 = vsel %vm617, %v609, %v614
  %v619 = vmul.f32 %v532, %v598
  %v620 = vmul.f32 %v533, %v598
  %v621 = vmul.f32 %v534, %v598
  %v622 = vmul.f32 %v535, %v598
  %v623 = vmul.f32 %v536, %v608
  %v624 = vmul.f32 %v537, %v608
  %v625 = vmul.f32 %v538, %v608
  %v626 = vmul.f32 %v539, %v608
  %v627 = vmul.f32 %v540, %v618
  %v628 = vmul.f32 %v541, %v618
  %v629 = vmul.f32 %v542, %v618
  %v630 = vmul.f32 %v543, %v618
  %v631 = vld [vmem:[%s9] sm:$0xf]
  %v632 = vld [vmem:[%s9 + $0x4] sm:$0xf]
  %v633 = vld [vmem:[%s9 + $0x8] sm:$0xf]
  %v634 = vpack.c.bf16 %v620, %v619
  %v635 = vpack.c.bf16 %v622, %v621
  %v636 = vpack.c.bf16 %v624, %v623
  %v637 = vpack.c.bf16 %v626, %v625
  %v638 = vpack.c.bf16 %v628, %v627
  %v639 = vpack.c.bf16 %v630, %v629
  %v640 = vld [vmem:[%s10] sm:$0xff]
  %v641 = vld [vmem:[%s10 + $0x8] sm:$0xff]
  %v642 = vld [vmem:[%s10 + $0x10] sm:$0xff]
  %644 = vset.pattern.permute.xlu0 0
  %645 = vperm.xlu0 %644, %v640
  %v646 = vpop.permute.xlu0 %645
  %649 = vset.pattern.permute.xlu0 0
  %650 = vperm.xlu0 %649, %v641
  %v651 = vpop.permute.xlu0 %650
  %654 = vset.pattern.permute.xlu0 0
  %655 = vperm.xlu0 %654, %v642
  %v656 = vpop.permute.xlu0 %655
  %v661 = vunpack.c.l.b16 %v631
  %v662 = vunpack.c.l.b16 %v632
  %v663 = vunpack.c.l.b16 %v633
  %v664 = vpack.c.b16 %v662, %v661
  %v665 = vpack.c.b16 %v663, %v663
  %vm666 = vcmask 785408
  %v668 = vsel %vm666, %v664, 0
  %v671 = vsel %vm666, %v665, 0
  %673 = vmatpush.bf16.msra.mxu0 0
  %674 = vmatpush.bf16.msra.mxu0 0
  %675 = vmatpush.bf16.msra.mxu0 %v639
  %676 = vmatpush.bf16.msra.mxu0 %v638
  %677 = vmatpush.bf16.msra.mxu0 %v637
  %678 = vmatpush.bf16.msra.mxu0 %v636
  %679 = vmatpush.bf16.msra.mxu0 %v635
  %680 = vmatpush.bf16.msra.mxu0 %v634
  %681 = vmatmul.bf16.gmra.mxu0 %v668
  %v682 = vpop.f32.mrf.mxu0
  %v683 = vadd.f32 %v646, %v682
  %v684 = vpop.f32.mrf.mxu0
  %v685 = vadd.f32 %v651, %v684
  %686 = vmatmul.bf16.gmra.mxu0 %v671
  %v687 = vpop.f32.mrf.mxu0
  %v688 = vadd.f32 %v656, %v687
  %v689 = vpop.f32.mrf.mxu0
  %690 = vdwg.mxu0
  %v691 = vrot.slane %v683, 4
  %v692 = vmax.f32 %v683, %v691
  %v693 = vrot.slane %v692, 2
  %v694 = vmax.f32 %v692, %v693
  %v695 = vrot.slane %v694, 1
  %v696 = vmax.f32 %v694, %v695
  %v697 = vrot.slane %v685, 4
  %v698 = vmax.f32 %v685, %v697
  %v699 = vrot.slane %v698, 2
  %v700 = vmax.f32 %v698, %v699
  %v701 = vrot.slane %v700, 1
  %v702 = vmax.f32 %v700, %v701
  %v703 = vrot.slane %v688, 4
  %v704 = vmax.f32 %v688, %v703
  %v705 = vrot.slane %v704, 2
  %v706 = vmax.f32 %v704, %v705
  %v707 = vrot.slane %v706, 1
  %v708 = vmax.f32 %v706, %v707
  %v709 = vsub.f32 %v683, %v696
  %v710 = vsub.f32 %v685, %v702
  %v711 = vsub.f32 %v688, %v708
  %v712 = vmul.f32 %v709, 1.442695
  %v713 = vpow.pop %v712
  %v714 = vmul.f32 %v710, 1.442695
  %v715 = vpow.pop %v714
  %v716 = vmul.f32 %v711, 1.442695
  %v717 = vpow.pop %v716
  %v718 = vrot.slane %v713, 4
  %v719 = vadd.f32 %v713, %v718
  %v720 = vrot.slane %v719, 2
  %v721 = vadd.f32 %v719, %v720
  %v722 = vrot.slane %v721, 1
  %v723 = vadd.f32 %v721, %v722
  %v724 = vrot.slane %v715, 4
  %v725 = vadd.f32 %v715, %v724
  %v726 = vrot.slane %v725, 2
  %v727 = vadd.f32 %v725, %v726
  %v728 = vrot.slane %v727, 1
  %v729 = vadd.f32 %v727, %v728
  %v730 = vrot.slane %v717, 4
  %v731 = vadd.f32 %v717, %v730
  %v732 = vrot.slane %v731, 2
  %v733 = vadd.f32 %v731, %v732
  %v734 = vrot.slane %v733, 1
  %v735 = vadd.f32 %v733, %v734
  %v736 = vrcp.pop %v723
  %v737 = vrcp.pop %v729
  %v738 = vrcp.pop %v735
  %v739 = vmul.f32 %v713, %v736
  %v740 = vmul.f32 %v715, %v737
  %v741 = vmul.f32 %v717, %v738
  %742 = vst [vmem:[%s11] sm:$0xff] %v739
  %743 = vst [vmem:[%s11 + $0x8] sm:$0xff] %v740
  %744 = vst [vmem:[%s11 + $0x10] sm:$0xff] %v741
  // Predicated region
  $region46: #{my_dqn_forward.1} parent=0 // pred_check
    _
  $region47: #{my_dqn_forward.1} parent=0 // pred_check_branch
    %746 = sbr.rel (0) target = $region49
  $region48: #{my_dqn_forward.1} parent=0 // pred_region
    _
  $region49: #{my_dqn_forward.1} parent=0 // pred_fallthru
    _
  // Predicated region
  $region50: #{my_dqn_forward.1} parent=0 // pred_check
    _
  $region51: #{my_dqn_forward.1} parent=0 // pred_check_branch
    %748 = sbr.rel (0) target = $region53
  $region52: #{my_dqn_forward.1} parent=0 // pred_region
    _
  $region53: #{my_dqn_forward.1} parent=0 // pred_fallthru
    _

</llo_original>
